<compile_context>
chip_gen: v5e
topology: v5e:2x2
jax: 0.10.0
libtpu: 0.0.40
codegen_flags: <defaults>
</compile_context>

<pallas_src>
import jax
import jax.numpy as jnp
from jax.experimental import pallas as pl
from jax.experimental.pallas import tpu as pltpu


def _round_up(n, m):
    return ((n + m - 1) // m) * m


def net2_kernel(x_ref,
                w1_ref, b1_ref,
                w2_ref, b2_ref,
                w3_ref, b3_ref,
                w4_ref, b4_ref,
                o_ref):
    """Fused 4-layer MLP (sigmoid after every layer) on one [tb, *] tile."""

    def sigmoid(z):
        # One EUP tanh per element; avoids a per-element VALU f32 divide.
        return 0.5 * (jnp.tanh(0.5 * z) + 1.0)

    def layer(h, w_ref, b):
        # bf16 operands on the MXU, f32 accumulation; bias + sigmoid in f32.
        # (astype is a no-op for the first layer: x arrives already in bf16.)
        z = jnp.dot(h.astype(jnp.bfloat16), w_ref[...],
                    preferred_element_type=jnp.float32) + b
        return sigmoid(z)

    # Hoist bias loads once per grid step (broadcast happens inside the add).
    b1 = b1_ref[...]
    b2 = b2_ref[...]
    b3 = b3_ref[...]
    b4 = b4_ref[...]

    h = x_ref[...]                      # [tb, d_k] bf16
    h = layer(h, w1_ref, b1)            # [tb, 128] f32
    h = layer(h, w2_ref, b2)            # [tb, 128] f32
    h = layer(h, w3_ref, b3)            # [tb, 128] f32
    h = layer(h, w4_ref, b4)            # [tb, 2]   f32

    # Narrow (unpadded) output store; masked vst is free given the compute
    # slack, and HBM writeback is 64x smaller than a 128-lane-padded store.
    o_ref[...] = h.astype(o_ref.dtype)


def net2_forward(x, params, *, tb_max=2048):
    """x: [B, d] float32; params: dict name -> (w [in,out] f32, b [1,out] f32)."""
    w1, b1 = params["fc1"]
    w2, b2 = params["fc2"]
    w3, b3 = params["fc3"]
    w4, b4 = params["fc4"]

    B, d = x.shape
    h1, h2, h3, out_dim = w1.shape[1], w2.shape[1], w3.shape[1], w4.shape[1]

    # --- feature padding ---
    # x / w1-rows: only round d up to a multiple of 8 (keeps input DMA small).
    # hidden dims: pad to 128 so internal matmuls / sigmoids are lane-dense.
    # output dim: NOT padded (narrow store).
    d_k = _round_up(d, 8)
    h1_p = _round_up(h1, 128)
    h2_p = _round_up(h2, 128)
    h3_p = _round_up(h3, 128)

    def pad_w(w, rows, cols):
        # Zero-padded rows are what cancels the sigmoid(0)=0.5 padded lanes of
        # the previous layer -- they must stay exactly zero.
        wp = jnp.pad(w, ((0, rows - w.shape[0]), (0, cols - w.shape[1])))
        return wp.astype(jnp.bfloat16)   # resident bf16 weights for the MXU

    def pad_b(b, cols):
        return jnp.pad(b, ((0, 0), (0, cols - b.shape[1])))  # keep f32

    w1p, b1p = pad_w(w1, d_k, h1_p), pad_b(b1, h1_p)
    w2p, b2p = pad_w(w2, h1_p, h2_p), pad_b(b2, h2_p)
    w3p, b3p = pad_w(w3, h2_p, h3_p), pad_b(b3, h3_p)
    w4p, b4p = pad_w(w4, h3_p, out_dim), pad_b(b4, out_dim)

    # --- batch tiling ---
    # Biggest tile up to tb_max (multiple of 8); force >=2 grid steps whenever
    # B >= 16 so both v7x TensorCores get work.
    tb_cap = _round_up(tb_max, 8)
    if B >= 16:
        tb = min(tb_cap, _round_up((B + 1) // 2, 8))
    else:
        tb = min(tb_cap, _round_up(B, 8))
    b_pad = _round_up(B, tb)
    grid = (b_pad // tb,)

    # bf16 input, feature dim padded only to d_k (zeros x zero w1-rows = 0).
    x_p = jnp.pad(x, ((0, b_pad - B), (0, d_k - d))).astype(jnp.bfloat16)

    def resident(shape):
        # weights/biases: same block every step -> DMA'd once, stay in VMEM.
        return pl.BlockSpec(shape, lambda i: (0, 0))

    in_specs = [
        pl.BlockSpec((tb, d_k), lambda i: (i, 0)),   # x tile (pipelined)
        resident((d_k, h1_p)), resident((1, h1_p)),
        resident((h1_p, h2_p)), resident((1, h2_p)),
        resident((h2_p, h3_p)), resident((1, h3_p)),
        resident((h3_p, out_dim)), resident((1, out_dim)),
    ]
    out_spec = pl.BlockSpec((tb, out_dim), lambda i: (i, 0))

    # Advisory cost estimate reflecting the actual (padded, post-optimization)
    # executed work and HBM traffic.
    exec_flops = 2 * b_pad * (d_k * h1_p + h1_p * h2_p + h2_p * h3_p
                              + h3_p * out_dim)
    exec_trans = b_pad * (h1_p + h2_p + h3_p + out_dim)
    bytes_accessed = (
        x_p.size * 2                                            # bf16 input
        + (w1p.size + w2p.size + w3p.size + w4p.size) * 2       # bf16 weights
        + (b1p.size + b2p.size + b3p.size + b4p.size) * 4       # f32 biases
        + b_pad * out_dim * 4)                                  # f32 output

    # TODO(synk): optionally pack the 4 weight matrices / biases into a single
    # resident array each to cut first-step DMA descriptors from 8 to 2.
    out_full = pl.pallas_call(
        net2_kernel,
        out_shape=jax.ShapeDtypeStruct((b_pad, out_dim), jnp.float32),
        grid=grid,
        in_specs=in_specs,
        out_specs=out_spec,
        compiler_params=pltpu.CompilerParams(
            dimension_semantics=("parallel",)),
        cost_estimate=pl.CostEstimate(
            flops=exec_flops,
            transcendentals=exec_trans,
            bytes_accessed=bytes_accessed),
    )(x_p, w1p, b1p, w2p, b2p, w3p, b3p, w4p, b4p)

    # Padded batch rows are garbage and MUST be sliced off before any consumer.
    return out_full[:B, :]


def init_net2_params(d, key):
    """Deterministic init mimicking PyTorch Linear default
    (uniform in +/- 1/sqrt(fan_in)). Weights stored as [in, out]."""
    dims = [(d, 50), (50, 25), (25, 100), (100, 2)]
    names = ["fc1", "fc2", "fc3", "fc4"]
    params = {}
    for name, (fan_in, fan_out) in zip(names, dims):
        key, kw, kb = jax.random.split(key, 3)
        bound = 1.0 / jnp.sqrt(jnp.float32(fan_in))
        w = jax.random.uniform(kw, (fan_in, fan_out), jnp.float32,
                               minval=-bound, maxval=bound)
        b = jax.random.uniform(kb, (1, fan_out), jnp.float32,
                               minval=-bound, maxval=bound)
        params[name] = (w, b)
    return params


def net2_reference(x, params, matmul_dtype=jnp.float32):
    """Plain-JAX reference. matmul_dtype=bfloat16 mirrors the kernel's
    bf16-operand / f32-accumulate matmuls exactly."""
    h = x
    for name in ["fc1", "fc2", "fc3", "fc4"]:
        w, b = params[name]
        z = jnp.dot(h.astype(matmul_dtype), w.astype(matmul_dtype),
                    preferred_element_type=jnp.float32) + b
        h = jax.nn.sigmoid(z)
    return h


if __name__ == "__main__":
    key = jax.random.PRNGKey(0)
    k_x, k_p = jax.random.split(key)

    B, d = 8, 32
    x = jax.random.normal(k_x, (B, d), dtype=jnp.float32)
    params = init_net2_params(d, k_p)

    out = jax.block_until_ready(net2_forward(x, params))
    assert out.shape == (B, 2), out.shape

    # Tight check against a reference matched to the kernel's numerics
    # (bf16 matmul operands, f32 accumulation, f32 output).
    ref_matched = net2_reference(x, params, matmul_dtype=jnp.bfloat16)
    assert jnp.allclose(out, ref_matched, atol=1e-5, rtol=1e-5), \
        "mismatch vs bf16-matched reference"

    # Loose check against the pure-f32 PyTorch-equivalent reference
    # (documents the accepted bf16 numerics change).
    ref_f32 = net2_reference(x, params, matmul_dtype=jnp.float32)
    assert jnp.allclose(out, ref_f32, atol=3e-2, rtol=3e-2), \
        "mismatch vs f32 reference beyond documented bf16 tolerance"

    # Exercise a multi-step grid too (covers the >=2-grid-steps v7x path).
    B2 = 40
    x2 = jax.random.normal(jax.random.PRNGKey(1), (B2, d), dtype=jnp.float32)
    out2 = jax.block_until_ready(net2_forward(x2, params))
    ref2 = net2_reference(x2, params, matmul_dtype=jnp.bfloat16)
    assert out2.shape == (B2, 2)
    assert jnp.allclose(out2, ref2, atol=1e-5, rtol=1e-5), \
        "multi-tile mismatch vs bf16-matched reference"

    print("KERNEL_OK")
</pallas_src>

<mosaic_0001>
module attributes {stable_mosaic.version = 11 : i64} {
  func.func @net2_kernel(%arg0: i32, %arg1: memref<8x32xbf16, #tpu.memory_space<vmem>>, %arg2: memref<32x128xbf16, #tpu.memory_space<vmem>>, %arg3: memref<1x128xf32, #tpu.memory_space<vmem>>, %arg4: memref<128x128xbf16, #tpu.memory_space<vmem>>, %arg5: memref<1x128xf32, #tpu.memory_space<vmem>>, %arg6: memref<128x128xbf16, #tpu.memory_space<vmem>>, %arg7: memref<1x128xf32, #tpu.memory_space<vmem>>, %arg8: memref<128x2xbf16, #tpu.memory_space<vmem>>, %arg9: memref<1x2xf32, #tpu.memory_space<vmem>>, %arg10: memref<8x2xf32, #tpu.memory_space<vmem>>) attributes {dimension_semantics = [#tpu.dimension_semantics<parallel>], iteration_bounds = array<i64: 1>, scalar_prefetch = 0 : i64, scratch_operands = 0 : i64, tpu.core_type = #tpu.core_type<tc>, window_params = [{transform_indices = @transform_0, window_bounds = array<i64: 8, 32>}, {pipeline_mode = #tpu.pipeline_mode<synchronous>, transform_indices = @transform_1, window_bounds = array<i64: 32, 128>}, {pipeline_mode = #tpu.pipeline_mode<synchronous>, transform_indices = @transform_2, window_bounds = array<i64: 1, 128>}, {pipeline_mode = #tpu.pipeline_mode<synchronous>, transform_indices = @transform_3, window_bounds = array<i64: 128, 128>}, {pipeline_mode = #tpu.pipeline_mode<synchronous>, transform_indices = @transform_4, window_bounds = array<i64: 1, 128>}, {pipeline_mode = #tpu.pipeline_mode<synchronous>, transform_indices = @transform_5, window_bounds = array<i64: 128, 128>}, {pipeline_mode = #tpu.pipeline_mode<synchronous>, transform_indices = @transform_6, window_bounds = array<i64: 1, 128>}, {pipeline_mode = #tpu.pipeline_mode<synchronous>, transform_indices = @transform_7, window_bounds = array<i64: 128, 2>}, {pipeline_mode = #tpu.pipeline_mode<synchronous>, transform_indices = @transform_8, window_bounds = array<i64: 1, 2>}, {transform_indices = @transform_9, window_bounds = array<i64: 8, 2>}]} {
    %c0 = arith.constant 0 : index
    %c0_0 = arith.constant 0 : index
    %0 = vector.load %arg3[%c0, %c0_0] : memref<1x128xf32, #tpu.memory_space<vmem>>, vector<1x128xf32>
    %c0_1 = arith.constant 0 : index
    %c0_2 = arith.constant 0 : index
    %1 = vector.load %arg5[%c0_1, %c0_2] : memref<1x128xf32, #tpu.memory_space<vmem>>, vector<1x128xf32>
    %c0_3 = arith.constant 0 : index
    %c0_4 = arith.constant 0 : index
    %2 = vector.load %arg7[%c0_3, %c0_4] : memref<1x128xf32, #tpu.memory_space<vmem>>, vector<1x128xf32>
    %c0_5 = arith.constant 0 : index
    %c0_6 = arith.constant 0 : index
    %3 = vector.load %arg9[%c0_5, %c0_6] : memref<1x2xf32, #tpu.memory_space<vmem>>, vector<1x2xf32>
    %c0_7 = arith.constant 0 : index
    %c0_8 = arith.constant 0 : index
    %4 = vector.load %arg1[%c0_7, %c0_8] : memref<8x32xbf16, #tpu.memory_space<vmem>>, vector<8x32xbf16>
    %c0_9 = arith.constant 0 : index
    %c0_10 = arith.constant 0 : index
    %5 = vector.load %arg2[%c0_9, %c0_10] : memref<32x128xbf16, #tpu.memory_space<vmem>>, vector<32x128xbf16>
    %cst = arith.constant dense<0.000000e+00> : vector<8x128xf32>
    %6 = tpu.matmul %4, %5, %cst {dimension_numbers = #tpu.dot_dimension_numbers<[1], [0], [0], [1], [0, 0, 1, 1], [], []>} : vector<8x32xbf16>, vector<32x128xbf16>, vector<8x128xf32> -> vector<8x128xf32>
    %7 = vector.broadcast %0 : vector<1x128xf32> to vector<8x128xf32>
    %8 = arith.addf %6, %7 : vector<8x128xf32>
    %cst_11 = arith.constant 5.000000e-01 : f32
    %9 = vector.broadcast %cst_11 : f32 to vector<8x128xf32>
    %10 = arith.mulf %9, %8 : vector<8x128xf32>
    %11 = math.tanh %10 : vector<8x128xf32>
    %cst_12 = arith.constant 1.000000e+00 : f32
    %12 = vector.broadcast %cst_12 : f32 to vector<8x128xf32>
    %13 = arith.addf %11, %12 : vector<8x128xf32>
    %cst_13 = arith.constant 5.000000e-01 : f32
    %14 = vector.broadcast %cst_13 : f32 to vector<8x128xf32>
    %15 = arith.mulf %14, %13 : vector<8x128xf32>
    %16 = arith.truncf %15 : vector<8x128xf32> to vector<8x128xbf16>
    %c0_14 = arith.constant 0 : index
    %c0_15 = arith.constant 0 : index
    %17 = vector.load %arg4[%c0_14, %c0_15] : memref<128x128xbf16, #tpu.memory_space<vmem>>, vector<128x128xbf16>
    %cst_16 = arith.constant dense<0.000000e+00> : vector<8x128xf32>
    %18 = tpu.matmul %16, %17, %cst_16 {dimension_numbers = #tpu.dot_dimension_numbers<[1], [0], [0], [1], [0, 0, 1, 1], [], []>} : vector<8x128xbf16>, vector<128x128xbf16>, vector<8x128xf32> -> vector<8x128xf32>
    %19 = vector.broadcast %1 : vector<1x128xf32> to vector<8x128xf32>
    %20 = arith.addf %18, %19 : vector<8x128xf32>
    %cst_17 = arith.constant 5.000000e-01 : f32
    %21 = vector.broadcast %cst_17 : f32 to vector<8x128xf32>
    %22 = arith.mulf %21, %20 : vector<8x128xf32>
    %23 = math.tanh %22 : vector<8x128xf32>
    %cst_18 = arith.constant 1.000000e+00 : f32
    %24 = vector.broadcast %cst_18 : f32 to vector<8x128xf32>
    %25 = arith.addf %23, %24 : vector<8x128xf32>
    %cst_19 = arith.constant 5.000000e-01 : f32
    %26 = vector.broadcast %cst_19 : f32 to vector<8x128xf32>
    %27 = arith.mulf %26, %25 : vector<8x128xf32>
    %28 = arith.truncf %27 : vector<8x128xf32> to vector<8x128xbf16>
    %c0_20 = arith.constant 0 : index
    %c0_21 = arith.constant 0 : index
    %29 = vector.load %arg6[%c0_20, %c0_21] : memref<128x128xbf16, #tpu.memory_space<vmem>>, vector<128x128xbf16>
    %cst_22 = arith.constant dense<0.000000e+00> : vector<8x128xf32>
    %30 = tpu.matmul %28, %29, %cst_22 {dimension_numbers = #tpu.dot_dimension_numbers<[1], [0], [0], [1], [0, 0, 1, 1], [], []>} : vector<8x128xbf16>, vector<128x128xbf16>, vector<8x128xf32> -> vector<8x128xf32>
    %31 = vector.broadcast %2 : vector<1x128xf32> to vector<8x128xf32>
    %32 = arith.addf %30, %31 : vector<8x128xf32>
    %cst_23 = arith.constant 5.000000e-01 : f32
    %33 = vector.broadcast %cst_23 : f32 to vector<8x128xf32>
    %34 = arith.mulf %33, %32 : vector<8x128xf32>
    %35 = math.tanh %34 : vector<8x128xf32>
    %cst_24 = arith.constant 1.000000e+00 : f32
    %36 = vector.broadcast %cst_24 : f32 to vector<8x128xf32>
    %37 = arith.addf %35, %36 : vector<8x128xf32>
    %cst_25 = arith.constant 5.000000e-01 : f32
    %38 = vector.broadcast %cst_25 : f32 to vector<8x128xf32>
    %39 = arith.mulf %38, %37 : vector<8x128xf32>
    %40 = arith.truncf %39 : vector<8x128xf32> to vector<8x128xbf16>
    %c0_26 = arith.constant 0 : index
    %c0_27 = arith.constant 0 : index
    %41 = vector.load %arg8[%c0_26, %c0_27] : memref<128x2xbf16, #tpu.memory_space<vmem>>, vector<128x2xbf16>
    %cst_28 = arith.constant dense<0.000000e+00> : vector<8x2xf32>
    %42 = tpu.matmul %40, %41, %cst_28 {dimension_numbers = #tpu.dot_dimension_numbers<[1], [0], [0], [1], [0, 0, 1, 1], [], []>} : vector<8x128xbf16>, vector<128x2xbf16>, vector<8x2xf32> -> vector<8x2xf32>
    %43 = vector.broadcast %3 : vector<1x2xf32> to vector<8x2xf32>
    %44 = arith.addf %42, %43 : vector<8x2xf32>
    %cst_29 = arith.constant 5.000000e-01 : f32
    %45 = vector.broadcast %cst_29 : f32 to vector<8x2xf32>
    %46 = arith.mulf %45, %44 : vector<8x2xf32>
    %47 = math.tanh %46 : vector<8x2xf32>
    %cst_30 = arith.constant 1.000000e+00 : f32
    %48 = vector.broadcast %cst_30 : f32 to vector<8x2xf32>
    %49 = arith.addf %47, %48 : vector<8x2xf32>
    %cst_31 = arith.constant 5.000000e-01 : f32
    %50 = vector.broadcast %cst_31 : f32 to vector<8x2xf32>
    %51 = arith.mulf %50, %49 : vector<8x2xf32>
    %c0_32 = arith.constant 0 : index
    %c0_33 = arith.constant 0 : index
    %52 = vector.load %arg10[%c0_32, %c0_33] : memref<8x2xf32, #tpu.memory_space<vmem>>, vector<8x2xf32>
    tpu.vector_store %arg10[%c0_32, %c0_33], %51 {strides = array<i32>} : memref<8x2xf32, #tpu.memory_space<vmem>>, vector<8x2xf32>,
    return
  }
  func.func @transform_0(%arg0: i32) -> (i32, i32) {
    %c0_i32 = arith.constant 0 : i32
    %c0_i32_0 = arith.constant 0 : i32
    return %arg0, %c0_i32 : i32, i32
  }
  func.func @transform_1(%arg0: i32) -> (i32, i32) {
    %c0_i32 = arith.constant 0 : i32
    %c0_i32_0 = arith.constant 0 : i32
    %c0_i32_1 = arith.constant 0 : i32
    return %c0_i32, %c0_i32_0 : i32, i32
  }
  func.func @transform_2(%arg0: i32) -> (i32, i32) {
    %c0_i32 = arith.constant 0 : i32
    %c0_i32_0 = arith.constant 0 : i32
    %c0_i32_1 = arith.constant 0 : i32
    return %c0_i32, %c0_i32_0 : i32, i32
  }
  func.func @transform_3(%arg0: i32) -> (i32, i32) {
    %c0_i32 = arith.constant 0 : i32
    %c0_i32_0 = arith.constant 0 : i32
    %c0_i32_1 = arith.constant 0 : i32
    return %c0_i32, %c0_i32_0 : i32, i32
  }
  func.func @transform_4(%arg0: i32) -> (i32, i32) {
    %c0_i32 = arith.constant 0 : i32
    %c0_i32_0 = arith.constant 0 : i32
    %c0_i32_1 = arith.constant 0 : i32
    return %c0_i32, %c0_i32_0 : i32, i32
  }
  func.func @transform_5(%arg0: i32) -> (i32, i32) {
    %c0_i32 = arith.constant 0 : i32
    %c0_i32_0 = arith.constant 0 : i32
    %c0_i32_1 = arith.constant 0 : i32
    return %c0_i32, %c0_i32_0 : i32, i32
  }
  func.func @transform_6(%arg0: i32) -> (i32, i32) {
    %c0_i32 = arith.constant 0 : i32
    %c0_i32_0 = arith.constant 0 : i32
    %c0_i32_1 = arith.constant 0 : i32
    return %c0_i32, %c0_i32_0 : i32, i32
  }
  func.func @transform_7(%arg0: i32) -> (i32, i32) {
    %c0_i32 = arith.constant 0 : i32
    %c0_i32_0 = arith.constant 0 : i32
    %c0_i32_1 = arith.constant 0 : i32
    return %c0_i32, %c0_i32_0 : i32, i32
  }
  func.func @transform_8(%arg0: i32) -> (i32, i32) {
    %c0_i32 = arith.constant 0 : i32
    %c0_i32_0 = arith.constant 0 : i32
    %c0_i32_1 = arith.constant 0 : i32
    return %c0_i32, %c0_i32_0 : i32, i32
  }
  func.func @transform_9(%arg0: i32) -> (i32, i32) {
    %c0_i32 = arith.constant 0 : i32
    %c0_i32_0 = arith.constant 0 : i32
    return %arg0, %c0_i32 : i32, i32
  }
}

</mosaic_0001>

<llo_original>
// kernel: tpu_custom_call.1
$region0: #{tpu_custom_call.1}
  #allocation0 [shape = 'u32[]', space=smem, size = 0x4, offset = 0x4, fixed_abs, tag = 'smem constant byte address 0x4 - core index']
  #allocation1 [shape = 'u32[72,128]{1,0:T(1,128)}', space=vmem, size = 0x9000, scoped, tag = 'internal scratch']
  %s0 = inlined_call_operand.hbm [shape: bf16[8,32], index: 0, kind: input, shape index: {}]
  %s1 = inlined_call_operand.hbm [shape: bf16[32,128], index: 1, kind: input, shape index: {}]
  %s2 = inlined_call_operand.vmem [shape: f32[1,128], index: 2, kind: input, shape index: {}]
  %s3 = inlined_call_operand.vmem [shape: bf16[128,128], index: 3, kind: input, shape index: {}]
  %s4 = inlined_call_operand.vmem [shape: f32[1,128], index: 4, kind: input, shape index: {}]
  %s5 = inlined_call_operand.hbm [shape: bf16[128,128], index: 5, kind: input, shape index: {}]
  %s6 = inlined_call_operand.vmem [shape: f32[1,128], index: 6, kind: input, shape index: {}]
  %s7 = inlined_call_operand.vmem [shape: bf16[128,2], index: 7, kind: input, shape index: {}]
  %s8 = inlined_call_operand.vmem [shape: f32[1,2], index: 8, kind: input, shape index: {}]
  %s9 = inlined_call_operand.vmem [shape: f32[8,2], index: 9, kind: output, shape index: {}]
  %s10 = sld [smem:[#allocation0]]
  $region58: #{tpu_custom_call.1} parent=0
    _
  %s12 = ssub.s32 1, %s10
  %s13 = scalar_select 0, %s12, %s10
  $region1: #{tpu_custom_call.1} parent=0
    #allocation2 [shape = 'u8[2048]{0}', space=vmem, size = 0x800, scoped, tag = 'input window, operand 0, single buffered']
    #allocation3 [shape = 's32[1]{0}', space=sflag, size = 0x4, scoped, tag = 'scoped memory for tpu_custom_call.1']
    #allocation4 [shape = 'u8[8192]{0}', space=vmem, size = 0x2000, scoped, tag = 'input window, operand 1, single buffered']
    #allocation5 [shape = 's32[1]{0}', space=sflag, size = 0x4, scoped, tag = 'scoped memory for tpu_custom_call.1']
    #allocation6 [shape = 'u8[32768]{0}', space=vmem, size = 0x8000, scoped, tag = 'input window, operand 5, single buffered']
    %14 = vsyncpa [#allocation3], 0
    %15 = vsyncpa [#allocation5], 0
    // Predicated region
    $region2: #{tpu_custom_call.1} parent=1 // pred_check
      _
    $region3: #{tpu_custom_call.1} parent=1 // pred_check_branch
      %17 = sbr.rel (0) target = $region5
    $region4: #{tpu_custom_call.1} parent=1 // pred_region
      %19 = vsyncadd [#allocation3], 0
      %s21 = sshll.u32 %s0, 4
      %s22 = int_to_ptr.hbm [resolvable:$true] %s21
      %s23 = sshll.u32 [#allocation2], 4
      %s24 = int_to_ptr.vmem [resolvable:$true] %s23
      %26 = dma.hbm_to_vmem [thread:$0]  %s22, 64, %s24, [#allocation3]
    $region5: #{tpu_custom_call.1} parent=1 // pred_fallthru
      _
    // Predicated region
    $region6: #{tpu_custom_call.1} parent=1 // pred_check
      _
    $region7: #{tpu_custom_call.1} parent=1 // pred_check_branch
      %28 = sbr.rel (0) target = $region9
    $region8: #{tpu_custom_call.1} parent=1 // pred_region
      %30 = vsyncadd [#allocation5], 0
      %s31 = sshll.u32 %s1, 4
      %s32 = int_to_ptr.hbm [resolvable:$true] %s31
      %s33 = sshll.u32 [#allocation4], 4
      %s34 = int_to_ptr.vmem [resolvable:$true] %s33
      %39 = dma.hbm_to_vmem [thread:$0]  %s32, 256, %s34, [#allocation5], 64, 64, 4
    $region9: #{tpu_custom_call.1} parent=1 // pred_fallthru
      _
    // Predicated region
    $region10: #{tpu_custom_call.1} parent=1 // pred_check
      _
    $region11: #{tpu_custom_call.1} parent=1 // pred_check_branch
      %41 = sbr.rel (0) target = $region13
    $region12: #{tpu_custom_call.1} parent=1 // pred_region
      _
    $region13: #{tpu_custom_call.1} parent=1 // pred_fallthru
      _
    // Predicated region
    $region14: #{tpu_custom_call.1} parent=1 // pred_check
      _
    $region15: #{tpu_custom_call.1} parent=1 // pred_check_branch
      %43 = sbr.rel (0) target = $region17
    $region16: #{tpu_custom_call.1} parent=1 // pred_region
      _
    $region17: #{tpu_custom_call.1} parent=1 // pred_fallthru
      _
    // Predicated region
    $region18: #{tpu_custom_call.1} parent=1 // pred_check
      _
    $region19: #{tpu_custom_call.1} parent=1 // pred_check_branch
      %45 = sbr.rel (0) target = $region21
    $region20: #{tpu_custom_call.1} parent=1 // pred_region
      _
    $region21: #{tpu_custom_call.1} parent=1 // pred_fallthru
      _
    // Predicated region
    $region22: #{tpu_custom_call.1} parent=1 // pred_check
      _
    $region23: #{tpu_custom_call.1} parent=1 // pred_check_branch
      %47 = sbr.rel (0) target = $region25
    $region24: #{tpu_custom_call.1} parent=1 // pred_region
      %49 = vsyncadd [#allocation5], 0
      %s50 = sshll.u32 %s5, 4
      %s51 = int_to_ptr.hbm [resolvable:$true] %s50
      %s52 = sshll.u32 [#allocation6], 4
      %s53 = int_to_ptr.vmem [resolvable:$true] %s52
      %58 = dma.hbm_to_vmem [thread:$0]  %s51, 1024, %s53, [#allocation5], 64, 64, 4
    $region25: #{tpu_custom_call.1} parent=1 // pred_fallthru
      _
    // Predicated region
    $region26: #{tpu_custom_call.1} parent=1 // pred_check
      _
    $region27: #{tpu_custom_call.1} parent=1 // pred_check_branch
      %60 = sbr.rel (0) target = $region29
    $region28: #{tpu_custom_call.1} parent=1 // pred_region
      _
    $region29: #{tpu_custom_call.1} parent=1 // pred_fallthru
      _
    // Predicated region
    $region30: #{tpu_custom_call.1} parent=1 // pred_check
      _
    $region31: #{tpu_custom_call.1} parent=1 // pred_check_branch
      %62 = sbr.rel (0) target = $region33
    $region32: #{tpu_custom_call.1} parent=1 // pred_region
      _
    $region33: #{tpu_custom_call.1} parent=1 // pred_fallthru
      _
    // Predicated region
    $region34: #{tpu_custom_call.1} parent=1 // pred_check
      _
    $region35: #{tpu_custom_call.1} parent=1 // pred_check_branch
      %64 = sbr.rel (0) target = $region37
    $region36: #{tpu_custom_call.1} parent=1 // pred_region
      _
    $region37: #{tpu_custom_call.1} parent=1 // pred_fallthru
      _
    // Predicated region
    $region38: #{tpu_custom_call.1} parent=1 // pred_check
      _
    $region39: #{tpu_custom_call.1} parent=1 // pred_check_branch
      %66 = sbr.rel (0) target = $region41
    $region40: #{tpu_custom_call.1} parent=1 // pred_region
      %68 = dma.done [#allocation3], 64
    $region41: #{tpu_custom_call.1} parent=1 // pred_fallthru
      _
    // Predicated region
    $region42: #{tpu_custom_call.1} parent=1 // pred_check
      _
    $region43: #{tpu_custom_call.1} parent=1 // pred_check_branch
      %70 = sbr.rel (0) target = $region45
    $region44: #{tpu_custom_call.1} parent=1 // pred_region
      %72 = dma.done [#allocation5], 256
    $region45: #{tpu_custom_call.1} parent=1 // pred_fallthru
      _
    // Predicated region
    $region46: #{tpu_custom_call.1} parent=1 // pred_check
      _
    $region47: #{tpu_custom_call.1} parent=1 // pred_check_branch
      %74 = sbr.rel (0) target = $region49
    $region48: #{tpu_custom_call.1} parent=1 // pred_region
      %76 = dma.done [#allocation5], 1024
    $region49: #{tpu_custom_call.1} parent=1 // pred_fallthru
      _
    %v78 = vld [vmem:[%s2] sm:$0x1]
    %v79 = vld [vmem:[%s4] sm:$0x1]
    %v80 = vld [vmem:[%s6] sm:$0x1]
    %v81 = vld [vmem:[%s8] sm:$0x1]
    %v82 = vld [vmem:[#allocation2] sm:$0xf]
    %v83 = vld [vmem:[#allocation4] sm:$0xf]
    %v84 = vld [vmem:[#allocation4 + $0x4] sm:$0xf]
    %v85 = vld [vmem:[#allocation4 + $0x8] sm:$0xf]
    %v86 = vld [vmem:[#allocation4 + $0xc] sm:$0xf]
    %v88 = vperm.slane %v78, 0
    %v94 = vunpack.c.l.b16 %v83
    %v95 = vunpack.c.l.b16 %v84
    %v96 = vunpack.c.l.b16 %v85
    %v97 = vunpack.c.l.b16 %v86
    %v98 = vpack.c.b16 %v95, %v94
    %v99 = vpack.c.b16 %v97, %v96
    %vm102 = vcmask 261120
    %v104 = vsel %vm102, %v82, 0
    %106 = vmatpush.bf16.msra.mxu0 0
    %107 = vmatpush.bf16.msra.mxu0 0
    %108 = vmatpush.bf16.msra.mxu0 0
    %109 = vmatpush.bf16.msra.mxu0 0
    %110 = vmatpush.bf16.msra.mxu0 0
    %111 = vmatpush.bf16.msra.mxu0 0
    %112 = vmatpush.bf16.msra.mxu0 %v99
    %113 = vmatpush.bf16.msra.mxu0 %v98
    %114 = vmatmul.bf16.gmra.mxu0 %v104
    %v115 = vpop.f32.mrf.mxu0
    %v116 = vadd.f32 %v88, %v115
    %v117 = vpop.f32.mrf.mxu0
    %118 = vdwg.mxu0
    %v119 = vmul.f32 %v116, 0.5
    %v120 = vtanh.pop %v119
    %v121 = vadd.f32 %v120, 1.0
    %v122 = vmul.f32 %v121, 0.5
    %v123 = vpack.c.bf16 %v122, %v122
    %v124 = vld [vmem:[%s3] sm:$0xf]
    %v125 = vld [vmem:[%s3 + $0x4] sm:$0xf]
    %v126 = vld [vmem:[%s3 + $0x8] sm:$0xf]
    %v127 = vld [vmem:[%s3 + $0xc] sm:$0xf]
    %v128 = vld [vmem:[%s3 + $0x10] sm:$0xf]
    %v129 = vld [vmem:[%s3 + $0x14] sm:$0xf]
    %v130 = vld [vmem:[%s3 + $0x18] sm:$0xf]
    %v131 = vld [vmem:[%s3 + $0x1c] sm:$0xf]
    %v132 = vld [vmem:[%s3 + $0x20] sm:$0xf]
    %v133 = vld [vmem:[%s3 + $0x24] sm:$0xf]
    %v134 = vld [vmem:[%s3 + $0x28] sm:$0xf]
    %v135 = vld [vmem:[%s3 + $0x2c] sm:$0xf]
    %v136 = vld [vmem:[%s3 + $0x30] sm:$0xf]
    %v137 = vld [vmem:[%s3 + $0x34] sm:$0xf]
    %v138 = vld [vmem:[%s3 + $0x38] sm:$0xf]
    %v139 = vld [vmem:[%s3 + $0x3c] sm:$0xf]
    %v141 = vperm.slane %v79, 0
    %v159 = vunpack.c.l.b16 %v124
    %v160 = vunpack.c.l.b16 %v125
    %v161 = vunpack.c.l.b16 %v126
    %v162 = vunpack.c.l.b16 %v127
    %v163 = vunpack.c.l.b16 %v128
    %v164 = vunpack.c.l.b16 %v129
    %v165 = vunpack.c.l.b16 %v130
    %v166 = vunpack.c.l.b16 %v131
    %v167 = vunpack.c.l.b16 %v132
    %v168 = vunpack.c.l.b16 %v133
    %v169 = vunpack.c.l.b16 %v134
    %v170 = vunpack.c.l.b16 %v135
    %v171 = vunpack.c.l.b16 %v136
    %v172 = vunpack.c.l.b16 %v137
    %v173 = vunpack.c.l.b16 %v138
    %v174 = vunpack.c.l.b16 %v139
    %v175 = vpack.c.b16 %v160, %v159
    %v176 = vpack.c.b16 %v162, %v161
    %v177 = vpack.c.b16 %v164, %v163
    %v178 = vpack.c.b16 %v166, %v165
    %v179 = vpack.c.b16 %v168, %v167
    %v180 = vpack.c.b16 %v170, %v169
    %v181 = vpack.c.b16 %v172, %v171
    %v182 = vpack.c.b16 %v174, %v173
    %191 = vmatpush.bf16.msra.mxu0 %v182
    %192 = vmatpush.bf16.msra.mxu0 %v181
    %193 = vmatpush.bf16.msra.mxu0 %v180
    %194 = vmatpush.bf16.msra.mxu0 %v179
    %195 = vmatpush.bf16.msra.mxu0 %v178
    %196 = vmatpush.bf16.msra.mxu0 %v177
    %197 = vmatpush.bf16.msra.mxu0 %v176
    %198 = vmatpush.bf16.msra.mxu0 %v175
    %199 = vmatmul.bf16.gmra.mxu0 %v123
    %v200 = vpop.f32.mrf.mxu0
    %v201 = vadd.f32 %v141, %v200
    %v202 = vpop.f32.mrf.mxu0
    %203 = vdwg.mxu0
    %v204 = vmul.f32 %v201, 0.5
    %v205 = vtanh.pop %v204
    %v206 = vadd.f32 %v205, 1.0
    %v207 = vmul.f32 %v206, 0.5
    %v208 = vpack.c.bf16 %v207, %v207
    %v209 = vld [vmem:[#allocation6] sm:$0xf]
    %v210 = vld [vmem:[#allocation6 + $0x4] sm:$0xf]
    %v211 = vld [vmem:[#allocation6 + $0x8] sm:$0xf]
    %v212 = vld [vmem:[#allocation6 + $0xc] sm:$0xf]
    %v213 = vld [vmem:[#allocation6 + $0x10] sm:$0xf]
    %v214 = vld [vmem:[#allocation6 + $0x14] sm:$0xf]
    %v215 = vld [vmem:[#allocation6 + $0x18] sm:$0xf]
    %v216 = vld [vmem:[#allocation6 + $0x1c] sm:$0xf]
    %v217 = vld [vmem:[#allocation6 + $0x20] sm:$0xf]
    %v218 = vld [vmem:[#allocation6 + $0x24] sm:$0xf]
    %v219 = vld [vmem:[#allocation6 + $0x28] sm:$0xf]
    %v220 = vld [vmem:[#allocation6 + $0x2c] sm:$0xf]
    %v221 = vld [vmem:[#allocation6 + $0x30] sm:$0xf]
    %v222 = vld [vmem:[#allocation6 + $0x34] sm:$0xf]
    %v223 = vld [vmem:[#allocation6 + $0x38] sm:$0xf]
    %v224 = vld [vmem:[#allocation6 + $0x3c] sm:$0xf]
    %v226 = vperm.slane %v80, 0
    %v244 = vunpack.c.l.b16 %v209
    %v245 = vunpack.c.l.b16 %v210
    %v246 = vunpack.c.l.b16 %v211
    %v247 = vunpack.c.l.b16 %v212
    %v248 = vunpack.c.l.b16 %v213
    %v249 = vunpack.c.l.b16 %v214
    %v250 = vunpack.c.l.b16 %v215
    %v251 = vunpack.c.l.b16 %v216
    %v252 = vunpack.c.l.b16 %v217
    %v253 = vunpack.c.l.b16 %v218
    %v254 = vunpack.c.l.b16 %v219
    %v255 = vunpack.c.l.b16 %v220
    %v256 = vunpack.c.l.b16 %v221
    %v257 = vunpack.c.l.b16 %v222
    %v258 = vunpack.c.l.b16 %v223
    %v259 = vunpack.c.l.b16 %v224
    %v260 = vpack.c.b16 %v245, %v244
    %v261 = vpack.c.b16 %v247, %v246
    %v262 = vpack.c.b16 %v249, %v248
    %v263 = vpack.c.b16 %v251, %v250
    %v264 = vpack.c.b16 %v253, %v252
    %v265 = vpack.c.b16 %v255, %v254
    %v266 = vpack.c.b16 %v257, %v256
    %v267 = vpack.c.b16 %v259, %v258
    %276 = vmatpush.bf16.msra.mxu0 %v267
    %277 = vmatpush.bf16.msra.mxu0 %v266
    %278 = vmatpush.bf16.msra.mxu0 %v265
    %279 = vmatpush.bf16.msra.mxu0 %v264
    %280 = vmatpush.bf16.msra.mxu0 %v263
    %281 = vmatpush.bf16.msra.mxu0 %v262
    %282 = vmatpush.bf16.msra.mxu0 %v261
    %283 = vmatpush.bf16.msra.mxu0 %v260
    %284 = vmatmul.bf16.gmra.mxu0 %v208
    %v285 = vpop.f32.mrf.mxu0
    %v286 = vadd.f32 %v226, %v285
    %v287 = vpop.f32.mrf.mxu0
    %288 = vdwg.mxu0
    %v289 = vmul.f32 %v286, 0.5
    %v290 = vtanh.pop %v289
    %v291 = vadd.f32 %v290, 1.0
    %v292 = vmul.f32 %v291, 0.5
    %v293 = vpack.c.bf16 %v292, %v292
    %v294 = vld [vmem:[%s7] sm:$0xf]
    %v295 = vld [vmem:[%s7 + $0x4] sm:$0xf]
    %v296 = vld [vmem:[%s7 + $0x8] sm:$0xf]
    %v297 = vld [vmem:[%s7 + $0xc] sm:$0xf]
    %v298 = vld [vmem:[%s7 + $0x10] sm:$0xf]
    %v299 = vld [vmem:[%s7 + $0x14] sm:$0xf]
    %v300 = vld [vmem:[%s7 + $0x18] sm:$0xf]
    %v301 = vld [vmem:[%s7 + $0x1c] sm:$0xf]
    %v302 = vld [vmem:[%s7 + $0x20] sm:$0xf]
    %v303 = vld [vmem:[%s7 + $0x24] sm:$0xf]
    %v304 = vld [vmem:[%s7 + $0x28] sm:$0xf]
    %v305 = vld [vmem:[%s7 + $0x2c] sm:$0xf]
    %v306 = vld [vmem:[%s7 + $0x30] sm:$0xf]
    %v307 = vld [vmem:[%s7 + $0x34] sm:$0xf]
    %v308 = vld [vmem:[%s7 + $0x38] sm:$0xf]
    %v309 = vld [vmem:[%s7 + $0x3c] sm:$0xf]
    %v311 = vperm.slane %v81, 0
    %v329 = vunpack.c.l.b16 %v294
    %v330 = vunpack.c.l.b16 %v295
    %v331 = vunpack.c.l.b16 %v296
    %v332 = vunpack.c.l.b16 %v297
    %v333 = vunpack.c.l.b16 %v298
    %v334 = vunpack.c.l.b16 %v299
    %v335 = vunpack.c.l.b16 %v300
    %v336 = vunpack.c.l.b16 %v301
    %v337 = vunpack.c.l.b16 %v302
    %v338 = vunpack.c.l.b16 %v303
    %v339 = vunpack.c.l.b16 %v304
    %v340 = vunpack.c.l.b16 %v305
    %v341 = vunpack.c.l.b16 %v306
    %v342 = vunpack.c.l.b16 %v307
    %v343 = vunpack.c.l.b16 %v308
    %v344 = vunpack.c.l.b16 %v309
    %v345 = vpack.c.b16 %v330, %v329
    %v346 = vpack.c.b16 %v332, %v331
    %v347 = vpack.c.b16 %v334, %v333
    %v348 = vpack.c.b16 %v336, %v335
    %v349 = vpack.c.b16 %v338, %v337
    %v350 = vpack.c.b16 %v340, %v339
    %v351 = vpack.c.b16 %v342, %v341
    %v352 = vpack.c.b16 %v344, %v343
    %361 = vmatpush.bf16.msra.mxu0 %v352
    %362 = vmatpush.bf16.msra.mxu0 %v351
    %363 = vmatpush.bf16.msra.mxu0 %v350
    %364 = vmatpush.bf16.msra.mxu0 %v349
    %365 = vmatpush.bf16.msra.mxu0 %v348
    %366 = vmatpush.bf16.msra.mxu0 %v347
    %367 = vmatpush.bf16.msra.mxu0 %v346
    %368 = vmatpush.bf16.msra.mxu0 %v345
    %369 = vmatmul.bf16.gmra.mxu0 %v293
    %v370 = vpop.f32.mrf.mxu0
    %v371 = vadd.f32 %v311, %v370
    %v372 = vpop.f32.mrf.mxu0
    %373 = vdwg.mxu0
    %v374 = vmul.f32 %v371, 0.5
    %v375 = vtanh.pop %v374
    %v376 = vadd.f32 %v375, 1.0
    %v377 = vmul.f32 %v376, 0.5
    %vm378 = vcmask 15360
    %379 = vst.msk [vmem:[%s9] sm:$0xff] %vm378, %v377
    // Predicated region
    $region50: #{tpu_custom_call.1} parent=1 // pred_check
      _
    $region51: #{tpu_custom_call.1} parent=1 // pred_check_branch
      %381 = sbr.rel (0) target = $region53
    $region52: #{tpu_custom_call.1} parent=1 // pred_region
      _
    $region53: #{tpu_custom_call.1} parent=1 // pred_fallthru
      _
    // Predicated region
    $region54: #{tpu_custom_call.1} parent=1 // pred_check
      _
    $region55: #{tpu_custom_call.1} parent=1 // pred_check_branch
      %383 = sbr.rel (0) target = $region57
    $region56: #{tpu_custom_call.1} parent=1 // pred_region
      _
    $region57: #{tpu_custom_call.1} parent=1 // pred_fallthru
      _
    %384 = vsyncpa [#allocation3], 1
    %385 = vsyncpa [#allocation5], 1

</llo_original>
